<compile_context>
chip_gen: v6e
topology: v6e:2x2x1
jax: 0.10.0
libtpu: 0.0.40
codegen_flags: <defaults>
</compile_context>

<pallas_src>
import functools

import jax
import jax.numpy as jnp
from jax.experimental import pallas as pl
from jax.experimental.pallas import tpu as pltpu


# ---------------------------------------------------------------------------
# Tile caps / VMEM budget (v7x-safe: 64 MiB physical VMEM; fine on v5e/v6e).
# Worst-case f32 working set with these caps:
#   2*(tm*tk + tk*tn + tm*tn)*4B (+ optional acc)  ~= 20 MiB  <<  _VMEM_LIMIT.
# ---------------------------------------------------------------------------
_TM_CAP = 1024
_TN_CAP = 512
_TK_CAP = 1024
_VMEM_LIMIT = 48 * 1024 * 1024


# ---------------------------------------------------------------------------
# Kernels
# ---------------------------------------------------------------------------
def _linear_kernel_fused(x_ref, w_ref, b_ref, o_ref):
    """Whole contraction in one grid step: fused matmul + bias add + store."""
    o_ref[...] = (
        jnp.dot(x_ref[...], w_ref[...], preferred_element_type=jnp.float32)
        + b_ref[...]
    ).astype(o_ref.dtype)


def _linear_kernel_multik_f32(x_ref, w_ref, b_ref, o_ref):
    """K-tiled, f32 output: accumulate directly into the resident output tile."""
    k = pl.program_id(2)

    @pl.when(k == 0)
    def _init():
        o_ref[...] = jnp.zeros_like(o_ref)

    o_ref[...] += jnp.dot(x_ref[...], w_ref[...],
                          preferred_element_type=jnp.float32)

    @pl.when(k == pl.num_programs(2) - 1)
    def _finalize():
        o_ref[...] += b_ref[...]


def _linear_kernel_multik_acc(x_ref, w_ref, b_ref, o_ref, acc_ref):
    """K-tiled, narrow output dtype: f32 VMEM accumulator, cast on finalize."""
    k = pl.program_id(2)

    @pl.when(k == 0)
    def _init():
        acc_ref[...] = jnp.zeros_like(acc_ref)

    acc_ref[...] += jnp.dot(x_ref[...], w_ref[...],
                            preferred_element_type=jnp.float32)

    @pl.when(k == pl.num_programs(2) - 1)
    def _finalize():
        o_ref[...] = (acc_ref[...] + b_ref[...]).astype(o_ref.dtype)


# ---------------------------------------------------------------------------
# Helpers
# ---------------------------------------------------------------------------
def _round_up(v: int, m: int) -> int:
    return ((v + m - 1) // m) * m


def _pick_tile(dim: int, cap: int, align: int) -> int:
    """Largest tile <= cap that is a multiple of `align` and divides the padded
    dim into equal blocks (avoids ~2x padding waste just past a boundary)."""
    dim_a = max(_round_up(dim, align), align)
    if dim_a <= cap:
        return dim_a
    n_blocks = -(-dim_a // cap)  # ceil
    return _round_up(-(-dim_a // n_blocks), align)


# ---------------------------------------------------------------------------
# Forward (jitted, tiles/dtype static)
# ---------------------------------------------------------------------------
@functools.partial(jax.jit,
                   static_argnames=("tn", "tk", "d_out", "compute_dtype"))
def _linear_forward(x, w_p, b_p, *, tn, tk, d_out, compute_dtype):
    """y = x @ W^T + b, with W already transposed/padded to w_p:[Kp, Np]."""
    B, d_in = x.shape
    Kp, Np = w_p.shape
    out_dtype = x.dtype                       # nn.Linear: output in x's dtype
    if compute_dtype is not None:
        x = x.astype(compute_dtype)

    # M tile: 16-row alignment for bf16 operands (full sublane pack), 8 for f32.
    m_align = 16 if x.dtype == jnp.bfloat16 else 8
    tm = _pick_tile(B, _TM_CAP, m_align)
    Mp = _round_up(B, tm)
    if (Mp, Kp) != (B, d_in):
        x = jnp.pad(x, ((0, Mp - B), (0, Kp - d_in)))

    gm, gn, gk = Mp // tm, Np // tn, Kp // tk

    if gk == 1:
        # Whole K in one tile: no accumulator, no init/finalize phases.
        kernel = _linear_kernel_fused
        grid = (gm, gn)
        in_specs = [
            pl.BlockSpec((tm, tk), lambda i, j: (i, 0)),
            pl.BlockSpec((tk, tn), lambda i, j: (0, j)),
            pl.BlockSpec((1, tn), lambda i, j: (0, j)),
        ]
        out_specs = pl.BlockSpec((tm, tn), lambda i, j: (i, j))
        scratch_shapes = []
        dim_sem = ("parallel", "parallel")
    else:
        grid = (gm, gn, gk)
        in_specs = [
            pl.BlockSpec((tm, tk), lambda i, j, k: (i, k)),
            pl.BlockSpec((tk, tn), lambda i, j, k: (k, j)),
            pl.BlockSpec((1, tn), lambda i, j, k: (0, j)),
        ]
        out_specs = pl.BlockSpec((tm, tn), lambda i, j, k: (i, j))
        dim_sem = ("parallel", "parallel", "arbitrary")
        if out_dtype == jnp.float32:
            # Accumulate directly in the resident f32 output tile (no scratch,
            # no finalize copy).
            kernel = _linear_kernel_multik_f32
            scratch_shapes = []
        else:
            kernel = _linear_kernel_multik_acc
            scratch_shapes = [pltpu.VMEM((tm, tn), jnp.float32)]

    out_p = pl.pallas_call(
        kernel,
        out_shape=jax.ShapeDtypeStruct((Mp, Np), out_dtype),
        grid_spec=pltpu.PrefetchScalarGridSpec(
            num_scalar_prefetch=0,
            grid=grid,
            in_specs=in_specs,
            out_specs=out_specs,
            scratch_shapes=scratch_shapes,
        ),
        compiler_params=pltpu.CompilerParams(
            dimension_semantics=dim_sem,
            vmem_limit_bytes=_VMEM_LIMIT,
        ),
    )(x, w_p, b_p)

    # Slice the lane-dense padded slab back to the true shape.  (If the model
    # keeps D_out a multiple of 128 — or downstream consumers accept the padded
    # slab — this extra copy disappears.)
    return out_p[:B, :d_out]


# ---------------------------------------------------------------------------
# Module wrapper: parameters prepared ONCE, reused across forward calls.
# ---------------------------------------------------------------------------
class PallasLinear:
    """torch.nn.Linear forward (y = x @ W^T + b) with params prepared once.

    weight: [D_out, D_in] (PyTorch layout), bias: [D_out].
    """

    def __init__(self, weight, bias, *, compute_dtype=None, batch_hint=None,
                 tn=None, tk=None):
        weight = jnp.asarray(weight)
        bias = jnp.asarray(bias)
        d_out, d_in = weight.shape
        self.d_out = d_out
        self.compute_dtype = compute_dtype

        # N/K tiles: even-divide, prefer 256-multiples (v6e/v7x 2x256^2 MXU),
        # 128 minimum so stores are lane-dense and MXU pushes are full-width.
        n_align = 256 if d_out >= 256 else 128
        k_align = 256 if d_in >= 256 else 128
        tn = tn or _pick_tile(d_out, _TN_CAP, n_align)
        tk = tk or _pick_tile(d_in, _TK_CAP, k_align)

        # v7x has 2 TensorCores: for single-M-block inference shapes make sure
        # the N axis still yields >= 2 parallel blocks.
        if (batch_hint is not None and batch_hint <= _TM_CAP
                and d_out >= 256 and _round_up(d_out, tn) // tn < 2):
            cand = _round_up(-(-d_out // 2), 256)
            if _round_up(d_out, cand) // cand < 2:
                cand = _round_up(-(-d_out // 2), 128)
            tn = cand

        self.tn, self.tk = tn, tk
        Kp = _round_up(d_in, tk)
        Np = _round_up(d_out, tn)

        # One-time weight transpose ([D_out, D_in] -> [D_in, D_out]), pad to a
        # lane-dense [Kp, Np] slab, optional bf16 cast — cached across calls so
        # the per-forward path never re-materializes the weight in HBM.
        w_t = weight.T
        if compute_dtype is not None:
            w_t = w_t.astype(compute_dtype)
        self.w_p = jnp.pad(w_t, ((0, Kp - d_in), (0, Np - d_out)))
        self.b_p = jnp.pad(bias.astype(jnp.float32),
                           (0, Np - d_out)).reshape(1, Np)

    def __call__(self, x):
        return _linear_forward(x, self.w_p, self.b_p,
                               tn=self.tn, tk=self.tk, d_out=self.d_out,
                               compute_dtype=self.compute_dtype)


if __name__ == "__main__":
    key = jax.random.PRNGKey(0)
    kx, kw, kb, kx2, kw2, kb2 = jax.random.split(key, 6)

    # --- Test 1: nn.Linear(32, 16), batch 8, f32 — single-K fused kernel. ---
    batch, d_in, d_out = 8, 32, 16
    bound = 1.0 / (d_in ** 0.5)
    weight = jax.random.uniform(kw, (d_out, d_in), minval=-bound, maxval=bound,
                                dtype=jnp.float32)
    bias = jax.random.uniform(kb, (d_out,), minval=-bound, maxval=bound,
                              dtype=jnp.float32)
    x = jax.random.normal(kx, (batch, d_in), dtype=jnp.float32)
    ref = x @ weight.T + bias

    lin = PallasLinear(weight, bias, batch_hint=batch)
    out = jax.block_until_ready(lin(x))
    assert out.shape == (batch, d_out)
    assert jnp.allclose(out, ref, atol=1e-5, rtol=1e-5)

    # bf16-operand / f32-accumulate path on the same params (v6e/v7x MXU).
    lin_bf16 = PallasLinear(weight, bias, compute_dtype=jnp.bfloat16,
                            batch_hint=batch)
    out_bf16 = jax.block_until_ready(lin_bf16(x))
    assert out_bf16.shape == (batch, d_out)
    assert jnp.allclose(out_bf16, ref, atol=3e-2, rtol=3e-2)

    # --- Test 2: forced K tiling (tk override) to exercise the multi-K paths. -
    batch2, d_in2, d_out2 = 16, 256, 128
    bound2 = 1.0 / (d_in2 ** 0.5)
    weight2 = jax.random.uniform(kw2, (d_out2, d_in2), minval=-bound2,
                                 maxval=bound2, dtype=jnp.float32)
    bias2 = jax.random.uniform(kb2, (d_out2,), minval=-bound2, maxval=bound2,
                               dtype=jnp.float32)
    x2 = jax.random.normal(kx2, (batch2, d_in2), dtype=jnp.float32)
    ref2 = x2 @ weight2.T + bias2

    lin2 = PallasLinear(weight2, bias2, tk=128, batch_hint=batch2)
    out2 = jax.block_until_ready(lin2(x2))       # f32 out: accumulate in o_ref
    assert jnp.allclose(out2, ref2, atol=1e-5, rtol=1e-5)

    out2_bf16 = jax.block_until_ready(
        lin2(x2.astype(jnp.bfloat16)))           # bf16 out: f32 scratch acc path
    assert out2_bf16.dtype == jnp.bfloat16
    assert jnp.allclose(out2_bf16.astype(jnp.float32), ref2,
                        atol=5e-2, rtol=5e-2)

    print("KERNEL_OK")
</pallas_src>

<mosaic_0001>
module attributes {stable_mosaic.version = 11 : i64} {
  func.func @_linear_kernel_fused(%arg0: i32, %arg1: i32, %arg2: memref<8x128xf32, #tpu.memory_space<vmem>>, %arg3: memref<128x128xf32, #tpu.memory_space<vmem>>, %arg4: memref<1x128xf32, #tpu.memory_space<vmem>>, %arg5: memref<8x128xf32, #tpu.memory_space<vmem>>) attributes {dimension_semantics = [#tpu.dimension_semantics<parallel>, #tpu.dimension_semantics<parallel>], iteration_bounds = array<i64: 1, 1>, scalar_prefetch = 0 : i64, scratch_operands = 0 : i64, tpu.core_type = #tpu.core_type<tc>, window_params = [{transform_indices = @transform_0, window_bounds = array<i64: 8, 128>}, {transform_indices = @transform_1, window_bounds = array<i64: 128, 128>}, {transform_indices = @transform_2, window_bounds = array<i64: 1, 128>}, {transform_indices = @transform_3, window_bounds = array<i64: 8, 128>}]} {
    %c0 = arith.constant 0 : index
    %c0_0 = arith.constant 0 : index
    %0 = vector.load %arg2[%c0, %c0_0] : memref<8x128xf32, #tpu.memory_space<vmem>>, vector<8x128xf32>
    %c0_1 = arith.constant 0 : index
    %c0_2 = arith.constant 0 : index
    %1 = vector.load %arg3[%c0_1, %c0_2] : memref<128x128xf32, #tpu.memory_space<vmem>>, vector<128x128xf32>
    %cst = arith.constant dense<0.000000e+00> : vector<8x128xf32>
    %2 = tpu.matmul %0, %1, %cst {dimension_numbers = #tpu.dot_dimension_numbers<[1], [0], [0], [1], [0, 0, 1, 1], [], []>} : vector<8x128xf32>, vector<128x128xf32>, vector<8x128xf32> -> vector<8x128xf32>
    %c0_3 = arith.constant 0 : index
    %c0_4 = arith.constant 0 : index
    %3 = vector.load %arg4[%c0_3, %c0_4] : memref<1x128xf32, #tpu.memory_space<vmem>>, vector<1x128xf32>
    %4 = vector.broadcast %3 : vector<1x128xf32> to vector<8x128xf32>
    %5 = arith.addf %2, %4 : vector<8x128xf32>
    %c0_5 = arith.constant 0 : index
    %c0_6 = arith.constant 0 : index
    %6 = vector.load %arg5[%c0_5, %c0_6] : memref<8x128xf32, #tpu.memory_space<vmem>>, vector<8x128xf32>
    tpu.vector_store %arg5[%c0_5, %c0_6], %5 {strides = array<i32>} : memref<8x128xf32, #tpu.memory_space<vmem>>, vector<8x128xf32>,
    return
  }
  func.func @transform_0(%arg0: i32, %arg1: i32) -> (i32, i32) {
    %c0_i32 = arith.constant 0 : i32
    %c0_i32_0 = arith.constant 0 : i32
    return %arg0, %c0_i32 : i32, i32
  }
  func.func @transform_1(%arg0: i32, %arg1: i32) -> (i32, i32) {
    %c0_i32 = arith.constant 0 : i32
    %c0_i32_0 = arith.constant 0 : i32
    return %c0_i32, %arg1 : i32, i32
  }
  func.func @transform_2(%arg0: i32, %arg1: i32) -> (i32, i32) {
    %c0_i32 = arith.constant 0 : i32
    %c0_i32_0 = arith.constant 0 : i32
    return %c0_i32, %arg1 : i32, i32
  }
  func.func @transform_3(%arg0: i32, %arg1: i32) -> (i32, i32) {
    %c0_i32 = arith.constant 0 : i32
    return %arg0, %arg1 : i32, i32
  }
}

</mosaic_0001>

<llo_original>
// kernel: _linear_forward.1
$region0: #{_linear_forward.1}
  #allocation0 [shape = 'u32[]', space=smem, size = 0x4, offset = 0x4, fixed_abs, tag = 'smem constant byte address 0x4 - core index']
  #allocation1 [shape = 'u32[144,128]{1,0:T(1,128)}', space=vmem, size = 0x12000, scoped, tag = 'internal scratch']
  %s0 = inlined_call_operand.vmem [shape: f32[8,128], index: 0, kind: input, shape index: {}]
  %s1 = inlined_call_operand.hbm [shape: f32[128,128], index: 1, kind: input, shape index: {}]
  %s2 = inlined_call_operand.vmem [shape: f32[1,128], index: 2, kind: input, shape index: {}]
  %s3 = inlined_call_operand.hbm [shape: f32[8,128], index: 3, kind: output, shape index: {}]
  %s4 = sld [smem:[#allocation0]]
  $region26: #{_linear_forward.1} parent=0
    _
  %s6 = ssub.s32 1, %s4
  %s7 = scalar_select 0, %s6, %s4
  $region1: #{_linear_forward.1} parent=0
    #allocation2 [shape = 'u8[65536]{0}', space=vmem, size = 0x10000, scoped, tag = 'input window, operand 1, single buffered']
    #allocation3 [shape = 's32[1]{0}', space=sflag, size = 0x4, scoped, tag = 'scoped memory for _linear_forward.1']
    #allocation4 [shape = 's32[1]{0}', space=sflag, size = 0x4, scoped, tag = 'scoped memory for _linear_forward.1']
    #allocation5 [shape = 'u8[4096]{0}', space=vmem, size = 0x1000, scoped, tag = 'output window, operand 0, single buffered']
    %8 = vsyncpa [#allocation3], 0
    %9 = vsyncpa [#allocation4], 0
    // Predicated region
    $region2: #{_linear_forward.1} parent=1 // pred_check
      _
    $region3: #{_linear_forward.1} parent=1 // pred_check_branch
      %11 = sbr.rel (0) target = $region5
    $region4: #{_linear_forward.1} parent=1 // pred_region
      _
    $region5: #{_linear_forward.1} parent=1 // pred_fallthru
      _
    // Predicated region
    $region6: #{_linear_forward.1} parent=1 // pred_check
      _
    $region7: #{_linear_forward.1} parent=1 // pred_check_branch
      %13 = sbr.rel (0) target = $region9
    $region8: #{_linear_forward.1} parent=1 // pred_region
      %s15 = ssub.s32 2048, 2048
      %16 = vsyncadd [#allocation3], %s15
      %s17 = sshll.u32 [#allocation2], 4
      %s18 = int_to_ptr.vmem [resolvable:$true] %s17
      %23 = dma.hbm_to_vmem [thread:$0]  %s1, 2048, %s18, [#allocation3], 128, 128, 8
    $region9: #{_linear_forward.1} parent=1 // pred_fallthru
      _
    // Predicated region
    $region10: #{_linear_forward.1} parent=1 // pred_check
      _
    $region11: #{_linear_forward.1} parent=1 // pred_check_branch
      %25 = sbr.rel (0) target = $region13
    $region12: #{_linear_forward.1} parent=1 // pred_region
      _
    $region13: #{_linear_forward.1} parent=1 // pred_fallthru
      _
    // Predicated region
    $region14: #{_linear_forward.1} parent=1 // pred_check
      _
    $region15: #{_linear_forward.1} parent=1 // pred_check_branch
      %27 = sbr.rel (0) target = $region17
    $region16: #{_linear_forward.1} parent=1 // pred_region
      %28 = dma.done [#allocation3], 2048
    $region17: #{_linear_forward.1} parent=1 // pred_fallthru
      _
    %v29 = vld [vmem:[%s0] sm:$0xff]
    %v30 = vld [vmem:[#allocation2] sm:$0xff]
    %v31 = vld [vmem:[#allocation2 + $0x8] sm:$0xff]
    %v32 = vld [vmem:[#allocation2 + $0x10] sm:$0xff]
    %v33 = vld [vmem:[#allocation2 + $0x18] sm:$0xff]
    %v34 = vld [vmem:[#allocation2 + $0x20] sm:$0xff]
    %v35 = vld [vmem:[#allocation2 + $0x28] sm:$0xff]
    %v36 = vld [vmem:[#allocation2 + $0x30] sm:$0xff]
    %v37 = vld [vmem:[#allocation2 + $0x38] sm:$0xff]
    %v38 = vld [vmem:[#allocation2 + $0x40] sm:$0xff]
    %v39 = vld [vmem:[#allocation2 + $0x48] sm:$0xff]
    %v40 = vld [vmem:[#allocation2 + $0x50] sm:$0xff]
    %v41 = vld [vmem:[#allocation2 + $0x58] sm:$0xff]
    %v42 = vld [vmem:[#allocation2 + $0x60] sm:$0xff]
    %v43 = vld [vmem:[#allocation2 + $0x68] sm:$0xff]
    %v44 = vld [vmem:[#allocation2 + $0x70] sm:$0xff]
    %v45 = vld [vmem:[#allocation2 + $0x78] sm:$0xff]
    %v46 = vld [vmem:[%s2] sm:$0x1]
    %v48 = vlaneseq
    %v49 = vshrl.u32 %v48, 7
    %v50 = vsub.s32 0, %v49
    %v51 = vrot.slane %v46, %v50
    %53 = vmatprep.subr.mxu0 0.0
    %54 = vmatpush1.msra.mxu0 %v45
    %55 = vmatprep.subr.mxu0 0.0
    %56 = vmatpush1.msra.mxu0 %v44
    %57 = vmatprep.subr.mxu0 0.0
    %58 = vmatpush1.msra.mxu0 %v43
    %59 = vmatprep.subr.mxu0 0.0
    %60 = vmatpush1.msra.mxu0 %v42
    %61 = vmatprep.subr.mxu0 0.0
    %62 = vmatpush1.msra.mxu0 %v41
    %63 = vmatprep.subr.mxu0 0.0
    %64 = vmatpush1.msra.mxu0 %v40
    %65 = vmatprep.subr.mxu0 0.0
    %66 = vmatpush1.msra.mxu0 %v39
    %67 = vmatprep.subr.mxu0 0.0
    %68 = vmatpush1.msra.mxu0 %v38
    %69 = vmatprep.subr.mxu0 0.0
    %70 = vmatpush1.msra.mxu0 %v37
    %71 = vmatprep.subr.mxu0 0.0
    %72 = vmatpush1.msra.mxu0 %v36
    %73 = vmatprep.subr.mxu0 0.0
    %74 = vmatpush1.msra.mxu0 %v35
    %75 = vmatprep.subr.mxu0 0.0
    %76 = vmatpush1.msra.mxu0 %v34
    %77 = vmatprep.subr.mxu0 0.0
    %78 = vmatpush1.msra.mxu0 %v33
    %79 = vmatprep.subr.mxu0 0.0
    %80 = vmatpush1.msra.mxu0 %v32
    %81 = vmatprep.subr.mxu0 0.0
    %82 = vmatpush1.msra.mxu0 %v31
    %83 = vmatprep.subr.mxu0 0.0
    %84 = vmatpush1.msra.mxu0 %v30
    %85 = vmatprep.subr.mxu0 0.0
    %86 = vmatpush2.msra.mxu0 0.0
    %87 = vmatprep.subr.mxu0 0.0
    %88 = vmatpush2.msra.mxu0 0.0
    %89 = vmatprep.subr.mxu0 0.0
    %90 = vmatpush2.msra.mxu0 0.0
    %91 = vmatprep.subr.mxu0 0.0
    %92 = vmatpush2.msra.mxu0 0.0
    %93 = vmatprep.subr.mxu0 0.0
    %94 = vmatpush2.msra.mxu0 0.0
    %95 = vmatprep.subr.mxu0 0.0
    %96 = vmatpush2.msra.mxu0 0.0
    %97 = vmatprep.subr.mxu0 0.0
    %98 = vmatpush2.msra.mxu0 0.0
    %99 = vmatprep.subr.mxu0 0.0
    %100 = vmatpush2.msra.mxu0 0.0
    %101 = vmatprep.subr.mxu0 0.0
    %102 = vmatpush2.msra.mxu0 0.0
    %103 = vmatprep.subr.mxu0 0.0
    %104 = vmatpush2.msra.mxu0 0.0
    %105 = vmatprep.subr.mxu0 0.0
    %106 = vmatpush2.msra.mxu0 0.0
    %107 = vmatprep.subr.mxu0 0.0
    %108 = vmatpush2.msra.mxu0 0.0
    %109 = vmatprep.subr.mxu0 0.0
    %110 = vmatpush2.msra.mxu0 0.0
    %111 = vmatprep.subr.mxu0 0.0
    %112 = vmatpush2.msra.mxu0 0.0
    %113 = vmatprep.subr.mxu0 0.0
    %114 = vmatpush2.msra.mxu0 0.0
    %115 = vmatprep.subr.mxu0 0.0
    %116 = vmatpush2.msra.mxu0 0.0
    %117 = vmatprep.mubr.f32.mxu0 0.0
    %118 = vmatmul.mubr.f32.gmra.mxu0 %v29
    %v119 = vpop.f32.mrf.mxu0
    %v120 = vadd.f32 %v51, %v119
    %v121 = vpop.f32.mrf.mxu0
    %122 = vdwg.mxu0
    %123 = vst [vmem:[#allocation5] sm:$0xff] %v120
    // Predicated region
    $region18: #{_linear_forward.1} parent=1 // pred_check
      _
    $region19: #{_linear_forward.1} parent=1 // pred_check_branch
      %125 = sbr.rel (0) target = $region21
    $region20: #{_linear_forward.1} parent=1 // pred_region
      %s127 = ssub.s32 128, 128
      %128 = vsyncadd [#allocation4], %s127
      %s130 = sshll.u32 [#allocation5], 4
      %s131 = int_to_ptr.vmem [resolvable:$true] %s130
      %133 = dma.vmem_to_hbm [thread:$0]  %s131, 128, %s3, [#allocation4]
    $region21: #{_linear_forward.1} parent=1 // pred_fallthru
      _
    // Predicated region
    $region22: #{_linear_forward.1} parent=1 // pred_check
      _
    $region23: #{_linear_forward.1} parent=1 // pred_check_branch
      %135 = sbr.rel (0) target = $region25
    $region24: #{_linear_forward.1} parent=1 // pred_region
      %136 = dma.done [#allocation4], 128
    $region25: #{_linear_forward.1} parent=1 // pred_fallthru
      _
    %137 = vsyncpa [#allocation3], 1
    %138 = vsyncpa [#allocation4], 1

</llo_original>
